<compile_context>
chip_gen: v7x
topology: tpu7x:2x2x1
jax: 0.10.0
libtpu: 0.0.40
codegen_flags: <defaults>
</compile_context>

<pallas_src>
import functools

import jax
import jax.numpy as jnp
from jax.experimental import pallas as pl
from jax.experimental.pallas import tpu as pltpu


def _pointnet_kernel(x_ref, p_ref, o_ref, *, B, N, KP, H, NUM_CLASSES,
                     OFF_W1, OFF_B1, OFF_W2, OFF_B2, OFF_W3, OFF_B3, INV_N):
    x = x_ref[...]                                    # (B*N, KP) f32, cols >= C_in are zero

    # Static, 8-row-aligned slices of the single packed parameter slab.
    w1 = p_ref[OFF_W1:OFF_W1 + KP, :]                 # (KP, H), rows >= C_in are zero
    b1 = p_ref[OFF_B1:OFF_B1 + 1, :]                  # (1, H)
    w2 = p_ref[OFF_W2:OFF_W2 + H, :]                  # (H, H)
    b2 = p_ref[OFF_B2:OFF_B2 + 1, :]                  # (1, H)
    w3 = p_ref[OFF_W3:OFF_W3 + H, :]                  # (H, H), cols >= NUM_CLASSES are zero
    b3 = p_ref[OFF_B3:OFF_B3 + 1, :]                  # (1, H), cols >= NUM_CLASSES are zero

    # ---- fc1 + ReLU on the MXU (zero-padded K contributes nothing).
    h = jnp.dot(x, w1, preferred_element_type=jnp.float32) + b1
    h = jnp.maximum(h, 0.0)

    # ---- fc2 + ReLU on the MXU over the whole flattened batch.
    h = jnp.dot(h, w2, preferred_element_type=jnp.float32) + b2
    h = jnp.maximum(h, 0.0)

    # ---- mean over points, computed in-kernel (no pooling-matrix operand).
    pooled = jnp.sum(h.reshape(B, N, H), axis=1) * INV_N       # (B, H)

    # ---- classifier head; padded columns of w3/b3 are zero, sliced off at the store.
    out = jnp.dot(pooled, w3, preferred_element_type=jnp.float32) + b3   # (B, H)
    o_ref[...] = out[:, :NUM_CLASSES].astype(o_ref.dtype)


def pointcloud_classifier(x, w1, b1, w2, b2, w3, b3):
    """x: (B, N, C_in) float32 -> logits (B, num_classes)."""
    B, N, C_in = x.shape
    H = w1.shape[1]
    num_classes = w3.shape[1]
    assert H % 8 == 0, "hidden width must be sublane-aligned for the packed param slab"
    assert num_classes <= H

    KP = ((C_in + 7) // 8) * 8                        # pad tiny contraction dim to 8

    # Flatten the batch and zero-pad the point channels to KP (layout plumbing in the
    # wrapper; the zero columns multiply zero rows of w1 so the result is unchanged).
    x_flat = jnp.pad(x.reshape(B * N, C_in), ((0, 0), (0, KP - C_in)))

    # Pack every parameter into one (rows, H) f32 slab; each section starts on an
    # 8-row boundary so in-kernel static slices are tile-aligned.
    def pad_to(a, rows, cols):
        return jnp.pad(a, ((0, rows - a.shape[0]), (0, cols - a.shape[1])))

    w1_blk = pad_to(w1, KP, H)                                  # rows [0, KP)
    b1_blk = pad_to(b1.reshape(1, H), 8, H)                     # rows [KP, KP+8)
    w2_blk = w2                                                 # rows [KP+8, KP+8+H)
    b2_blk = pad_to(b2.reshape(1, H), 8, H)                     # rows [KP+8+H, KP+16+H)
    w3_blk = pad_to(w3, H, H)                                   # rows [KP+16+H, KP+16+2H)
    b3_blk = pad_to(b3.reshape(1, num_classes), 8, H)           # rows [KP+16+2H, ...)
    params = jnp.concatenate([w1_blk, b1_blk, w2_blk, b2_blk, w3_blk, b3_blk], axis=0)

    OFF_W1 = 0
    OFF_B1 = KP
    OFF_W2 = KP + 8
    OFF_B2 = KP + 8 + H
    OFF_W3 = KP + 16 + H
    OFF_B3 = KP + 16 + 2 * H

    kernel = functools.partial(
        _pointnet_kernel,
        B=B, N=N, KP=KP, H=H, NUM_CLASSES=num_classes,
        OFF_W1=OFF_W1, OFF_B1=OFF_B1, OFF_W2=OFF_W2, OFF_B2=OFF_B2,
        OFF_W3=OFF_W3, OFF_B3=OFF_B3, INV_N=1.0 / float(N))

    vmem = pltpu.MemorySpace.VMEM
    # No grid: two input DMAs (x, packed params), one output store.  Everything is a
    # full-array VMEM block, so there is zero per-step pipelining overhead.
    return pl.pallas_call(
        kernel,
        out_shape=jax.ShapeDtypeStruct((B, num_classes), jnp.float32),
        in_specs=[pl.BlockSpec(memory_space=vmem),
                  pl.BlockSpec(memory_space=vmem)],
        out_specs=pl.BlockSpec(memory_space=vmem),
    )(x_flat, params)


def reference(x, w1, b1, w2, b2, w3, b3):
    hp = jax.lax.Precision.HIGHEST
    h = jnp.maximum(jnp.einsum("bnc,ch->bnh", x, w1, precision=hp) + b1, 0.0)
    h = jnp.maximum(jnp.einsum("bnh,hk->bnk", h, w2, precision=hp) + b2, 0.0)
    pooled = h.mean(axis=1)
    return jnp.einsum("bh,hk->bk", pooled, w3, precision=hp) + b3


if __name__ == "__main__":
    # Small shapes consistent with the module:
    # batch=2, num_points=128, in_channels=3, hidden_channels=64, num_classes=2
    B, N, C_IN, H, NUM_CLASSES = 2, 128, 3, 64, 2

    key = jax.random.PRNGKey(0)
    kx, k1, k2, k3, k4, k5, k6 = jax.random.split(key, 7)

    x = jax.random.normal(kx, (B, N, C_IN), dtype=jnp.float32)

    # Deterministic synthetic parameters (shapes from the nn.Linear definitions,
    # stored transposed so the kernel computes x @ W + b).
    w1 = jax.random.normal(k1, (C_IN, H), dtype=jnp.float32) * 0.1
    b1 = jax.random.normal(k2, (H,), dtype=jnp.float32) * 0.1
    w2 = jax.random.normal(k3, (H, H), dtype=jnp.float32) * 0.1
    b2 = jax.random.normal(k4, (H,), dtype=jnp.float32) * 0.1
    w3 = jax.random.normal(k5, (H, NUM_CLASSES), dtype=jnp.float32) * 0.1
    b3 = jax.random.normal(k6, (NUM_CLASSES,), dtype=jnp.float32) * 0.1

    out = pointcloud_classifier(x, w1, b1, w2, b2, w3, b3)
    out = jax.block_until_ready(out)

    ref = reference(x, w1, b1, w2, b2, w3, b3)
    assert out.shape == (B, NUM_CLASSES)
    assert jnp.allclose(out, ref, atol=1e-3, rtol=1e-3), (out, ref)

    print("KERNEL_OK")
</pallas_src>

<mosaic_0001>
module attributes {stable_mosaic.version = 11 : i64} {
  func.func @_pointnet_kernel(%arg0: memref<256x8xf32, #tpu.memory_space<vmem>>, %arg1: memref<160x64xf32, #tpu.memory_space<vmem>>, %arg2: memref<2x2xf32, #tpu.memory_space<vmem>>) attributes {dimension_semantics = [], scalar_prefetch = 0 : i64, scratch_operands = 0 : i64, tpu.core_type = #tpu.core_type<tc>} {
    %c0 = arith.constant 0 : index
    %c0_0 = arith.constant 0 : index
    %0 = vector.load %arg0[%c0, %c0_0] : memref<256x8xf32, #tpu.memory_space<vmem>>, vector<256x8xf32>
    %c0_1 = arith.constant 0 : index
    %c0_2 = arith.constant 0 : index
    %1 = vector.load %arg1[%c0_1, %c0_2] : memref<160x64xf32, #tpu.memory_space<vmem>>, vector<8x64xf32>
    %c8 = arith.constant 8 : index
    %c0_3 = arith.constant 0 : index
    %2 = vector.load %arg1[%c8, %c0_3] : memref<160x64xf32, #tpu.memory_space<vmem>>, vector<1x64xf32>
    %c16 = arith.constant 16 : index
    %c0_4 = arith.constant 0 : index
    %3 = vector.load %arg1[%c16, %c0_4] : memref<160x64xf32, #tpu.memory_space<vmem>>, vector<64x64xf32>
    %c80 = arith.constant 80 : index
    %c0_5 = arith.constant 0 : index
    %4 = vector.load %arg1[%c80, %c0_5] : memref<160x64xf32, #tpu.memory_space<vmem>>, vector<1x64xf32>
    %c88 = arith.constant 88 : index
    %c0_6 = arith.constant 0 : index
    %5 = vector.load %arg1[%c88, %c0_6] : memref<160x64xf32, #tpu.memory_space<vmem>>, vector<64x64xf32>
    %c152 = arith.constant 152 : index
    %c0_7 = arith.constant 0 : index
    %6 = vector.load %arg1[%c152, %c0_7] : memref<160x64xf32, #tpu.memory_space<vmem>>, vector<1x64xf32>
    %cst = arith.constant dense<0.000000e+00> : vector<256x64xf32>
    %7 = tpu.matmul %0, %1, %cst {dimension_numbers = #tpu.dot_dimension_numbers<[1], [0], [0], [1], [0, 0, 1, 1], [], []>} : vector<256x8xf32>, vector<8x64xf32>, vector<256x64xf32> -> vector<256x64xf32>
    %8 = vector.broadcast %2 : vector<1x64xf32> to vector<256x64xf32>
    %9 = arith.addf %7, %8 : vector<256x64xf32>
    %cst_8 = arith.constant 0.000000e+00 : f32
    %10 = vector.broadcast %cst_8 : f32 to vector<256x64xf32>
    %11 = arith.maximumf %9, %10 : vector<256x64xf32>
    %cst_9 = arith.constant dense<0.000000e+00> : vector<256x64xf32>
    %12 = tpu.matmul %11, %3, %cst_9 {dimension_numbers = #tpu.dot_dimension_numbers<[1], [0], [0], [1], [0, 0, 1, 1], [], []>} : vector<256x64xf32>, vector<64x64xf32>, vector<256x64xf32> -> vector<256x64xf32>
    %13 = vector.broadcast %4 : vector<1x64xf32> to vector<256x64xf32>
    %14 = arith.addf %12, %13 : vector<256x64xf32>
    %cst_10 = arith.constant 0.000000e+00 : f32
    %15 = vector.broadcast %cst_10 : f32 to vector<256x64xf32>
    %16 = arith.maximumf %14, %15 : vector<256x64xf32>
    %17 = vector.shape_cast %16 : vector<256x64xf32> to vector<2x128x64xf32>
    %cst_11 = arith.constant dense<0.000000e+00> : vector<2x64xf32>
    %18 = vector.multi_reduction <add>, %17, %cst_11 [1] : vector<2x128x64xf32> to vector<2x64xf32>
    %cst_12 = arith.constant 7.812500e-03 : f32
    %19 = vector.broadcast %cst_12 : f32 to vector<2x64xf32>
    %20 = arith.mulf %18, %19 : vector<2x64xf32>
    %cst_13 = arith.constant dense<0.000000e+00> : vector<2x64xf32>
    %21 = tpu.matmul %20, %5, %cst_13 {dimension_numbers = #tpu.dot_dimension_numbers<[1], [0], [0], [1], [0, 0, 1, 1], [], []>} : vector<2x64xf32>, vector<64x64xf32>, vector<2x64xf32> -> vector<2x64xf32>
    %22 = vector.broadcast %6 : vector<1x64xf32> to vector<2x64xf32>
    %23 = arith.addf %21, %22 : vector<2x64xf32>
    %24 = vector.extract_strided_slice %23 {offsets = [0, 0], sizes = [2, 2], strides = [1, 1]} : vector<2x64xf32> to vector<2x2xf32>
    %c0_14 = arith.constant 0 : index
    %c0_15 = arith.constant 0 : index
    %25 = vector.load %arg2[%c0_14, %c0_15] : memref<2x2xf32, #tpu.memory_space<vmem>>, vector<2x2xf32>
    tpu.vector_store %arg2[%c0_14, %c0_15], %24 {strides = array<i32>} : memref<2x2xf32, #tpu.memory_space<vmem>>, vector<2x2xf32>,
    return
  }
}

</mosaic_0001>

<llo_original>
// kernel: tpu_custom_call.1
$region0: #{tpu_custom_call.1}
  #allocation0 [shape = 'u32[]', space=smem, size = 0x4, offset = 0x4, fixed_abs, tag = 'smem constant byte address 0x4 - core index']
  #allocation1 [shape = 'u32[144,128]{1,0:T(1,128)}', space=vmem, size = 0x12000, scoped, tag = 'internal scratch']
  %s0 = inlined_call_operand.vmem [shape: f32[256,8], index: 0, kind: input, shape index: {}]
  %s1 = inlined_call_operand.vmem [shape: f32[160,64], index: 1, kind: input, shape index: {}]
  %s2 = inlined_call_operand.hbm [shape: f32[2,2], index: 2, kind: output, shape index: {}]
  %s3 = sld [smem:[#allocation0]]
  $region18: #{tpu_custom_call.1} parent=0
    _
  %s5 = ssub.s32 1, %s3
  %s6 = scalar_select 0, %s5, %s3
  $region1: #{tpu_custom_call.1} parent=0
    #allocation2 [shape = 'u8[1024]{0}', space=vmem, size = 0x400, scoped, tag = 'output window, operand 0, single buffered']
    #allocation3 [shape = 's32[1]{0}', space=sflag, size = 0x4, scoped, tag = 'scoped memory for tpu_custom_call.1']
    %7 = vsyncpa [#allocation3], 0
    // Predicated region
    $region2: #{tpu_custom_call.1} parent=1 // pred_check
      _
    $region3: #{tpu_custom_call.1} parent=1 // pred_check_branch
      %9 = sbr.rel (0) target = $region5
    $region4: #{tpu_custom_call.1} parent=1 // pred_region
      _
    $region5: #{tpu_custom_call.1} parent=1 // pred_fallthru
      _
    // Predicated region
    $region6: #{tpu_custom_call.1} parent=1 // pred_check
      _
    $region7: #{tpu_custom_call.1} parent=1 // pred_check_branch
      %11 = sbr.rel (0) target = $region9
    $region8: #{tpu_custom_call.1} parent=1 // pred_region
      _
    $region9: #{tpu_custom_call.1} parent=1 // pred_fallthru
      _
    %v12 = vld [vmem:[%s0] sm:$0xff]
    %v13 = vld [vmem:[%s0 + $0x8] sm:$0xff]
    %v14 = vld [vmem:[%s0 + $0x10] sm:$0xff]
    %v15 = vld [vmem:[%s0 + $0x18] sm:$0xff]
    %v16 = vld [vmem:[%s0 + $0x20] sm:$0xff]
    %v17 = vld [vmem:[%s0 + $0x28] sm:$0xff]
    %v18 = vld [vmem:[%s0 + $0x30] sm:$0xff]
    %v19 = vld [vmem:[%s0 + $0x38] sm:$0xff]
    %v20 = vld [vmem:[%s0 + $0x40] sm:$0xff]
    %v21 = vld [vmem:[%s0 + $0x48] sm:$0xff]
    %v22 = vld [vmem:[%s0 + $0x50] sm:$0xff]
    %v23 = vld [vmem:[%s0 + $0x58] sm:$0xff]
    %v24 = vld [vmem:[%s0 + $0x60] sm:$0xff]
    %v25 = vld [vmem:[%s0 + $0x68] sm:$0xff]
    %v26 = vld [vmem:[%s0 + $0x70] sm:$0xff]
    %v27 = vld [vmem:[%s0 + $0x78] sm:$0xff]
    %v28 = vld [vmem:[%s0 + $0x80] sm:$0xff]
    %v29 = vld [vmem:[%s0 + $0x88] sm:$0xff]
    %v30 = vld [vmem:[%s0 + $0x90] sm:$0xff]
    %v31 = vld [vmem:[%s0 + $0x98] sm:$0xff]
    %v32 = vld [vmem:[%s0 + $0xa0] sm:$0xff]
    %v33 = vld [vmem:[%s0 + $0xa8] sm:$0xff]
    %v34 = vld [vmem:[%s0 + $0xb0] sm:$0xff]
    %v35 = vld [vmem:[%s0 + $0xb8] sm:$0xff]
    %v36 = vld [vmem:[%s0 + $0xc0] sm:$0xff]
    %v37 = vld [vmem:[%s0 + $0xc8] sm:$0xff]
    %v38 = vld [vmem:[%s0 + $0xd0] sm:$0xff]
    %v39 = vld [vmem:[%s0 + $0xd8] sm:$0xff]
    %v40 = vld [vmem:[%s0 + $0xe0] sm:$0xff]
    %v41 = vld [vmem:[%s0 + $0xe8] sm:$0xff]
    %v42 = vld [vmem:[%s0 + $0xf0] sm:$0xff]
    %v43 = vld [vmem:[%s0 + $0xf8] sm:$0xff]
    %v44 = vld [vmem:[%s1] sm:$0xff]
    %v45 = vld [vmem:[%s1 + $0x8] sm:$0x1]
    %v46 = vld [vmem:[%s1 + $0x10] sm:$0xff]
    %v47 = vld [vmem:[%s1 + $0x18] sm:$0xff]
    %v48 = vld [vmem:[%s1 + $0x20] sm:$0xff]
    %v49 = vld [vmem:[%s1 + $0x28] sm:$0xff]
    %v50 = vld [vmem:[%s1 + $0x30] sm:$0xff]
    %v51 = vld [vmem:[%s1 + $0x38] sm:$0xff]
    %v52 = vld [vmem:[%s1 + $0x40] sm:$0xff]
    %v53 = vld [vmem:[%s1 + $0x48] sm:$0xff]
    %v54 = vld [vmem:[%s1 + $0x50] sm:$0x1]
    %v55 = vld [vmem:[%s1 + $0x58] sm:$0xff]
    %v56 = vld [vmem:[%s1 + $0x60] sm:$0xff]
    %v57 = vld [vmem:[%s1 + $0x68] sm:$0xff]
    %v58 = vld [vmem:[%s1 + $0x70] sm:$0xff]
    %v59 = vld [vmem:[%s1 + $0x78] sm:$0xff]
    %v60 = vld [vmem:[%s1 + $0x80] sm:$0xff]
    %v61 = vld [vmem:[%s1 + $0x88] sm:$0xff]
    %v62 = vld [vmem:[%s1 + $0x90] sm:$0xff]
    %v63 = vld [vmem:[%s1 + $0x98] sm:$0x1]
    %v64 = vlaneseq
    %v65 = vshrl.u32 %v64, 7
    %v66 = vsub.s32 0, %v65
    %v67 = vrot.slane %v45, %v66
    %vm68 = vcmask 64512
    %v70 = vsel %vm68, %v12, 0
    %v73 = vsel %vm68, %v13, 0
    %v76 = vsel %vm68, %v14, 0
    %v79 = vsel %vm68, %v15, 0
    %v82 = vsel %vm68, %v16, 0
    %v85 = vsel %vm68, %v17, 0
    %v88 = vsel %vm68, %v18, 0
    %v91 = vsel %vm68, %v19, 0
    %v94 = vsel %vm68, %v20, 0
    %v97 = vsel %vm68, %v21, 0
    %v100 = vsel %vm68, %v22, 0
    %v103 = vsel %vm68, %v23, 0
    %v106 = vsel %vm68, %v24, 0
    %v109 = vsel %vm68, %v25, 0
    %v112 = vsel %vm68, %v26, 0
    %v115 = vsel %vm68, %v27, 0
    %v118 = vsel %vm68, %v28, 0
    %v121 = vsel %vm68, %v29, 0
    %v124 = vsel %vm68, %v30, 0
    %v127 = vsel %vm68, %v31, 0
    %v130 = vsel %vm68, %v32, 0
    %v133 = vsel %vm68, %v33, 0
    %v136 = vsel %vm68, %v34, 0
    %v139 = vsel %vm68, %v35, 0
    %v142 = vsel %vm68, %v36, 0
    %v145 = vsel %vm68, %v37, 0
    %v148 = vsel %vm68, %v38, 0
    %v151 = vsel %vm68, %v39, 0
    %v154 = vsel %vm68, %v40, 0
    %v157 = vsel %vm68, %v41, 0
    %v160 = vsel %vm68, %v42, 0
    %v163 = vsel %vm68, %v43, 0
    %165 = vmatprep.subr.mxu0 0.0
    %166 = vmatpush1.msra.mxu0 %v44
    %167 = vmatprep.subr.mxu0 0.0
    %168 = vmatpush1.msra.mxu0 0.0
    %169 = vmatprep.subr.mxu0 0.0
    %170 = vmatpush1.msra.mxu0 0.0
    %171 = vmatprep.subr.mxu0 0.0
    %172 = vmatpush1.msra.mxu0 0.0
    %173 = vmatprep.subr.mxu0 0.0
    %174 = vmatpush1.msra.mxu0 0.0
    %175 = vmatprep.subr.mxu0 0.0
    %176 = vmatpush1.msra.mxu0 0.0
    %177 = vmatprep.subr.mxu0 0.0
    %178 = vmatpush1.msra.mxu0 0.0
    %179 = vmatprep.subr.mxu0 0.0
    %180 = vmatpush1.msra.mxu0 0.0
    %181 = vmatprep.subr.mxu0 0.0
    %182 = vmatpush1.msra.mxu0 0.0
    %183 = vmatprep.subr.mxu0 0.0
    %184 = vmatpush1.msra.mxu0 0.0
    %185 = vmatprep.subr.mxu0 0.0
    %186 = vmatpush1.msra.mxu0 0.0
    %187 = vmatprep.subr.mxu0 0.0
    %188 = vmatpush1.msra.mxu0 0.0
    %189 = vmatprep.subr.mxu0 0.0
    %190 = vmatpush1.msra.mxu0 0.0
    %191 = vmatprep.subr.mxu0 0.0
    %192 = vmatpush1.msra.mxu0 0.0
    %193 = vmatprep.subr.mxu0 0.0
    %194 = vmatpush1.msra.mxu0 0.0
    %195 = vmatprep.subr.mxu0 0.0
    %196 = vmatpush1.msra.mxu0 0.0
    %197 = vmatprep.subr.mxu0 0.0
    %198 = vmatpush1.msra.mxu0 0.0
    %199 = vmatprep.subr.mxu0 0.0
    %200 = vmatpush1.msra.mxu0 0.0
    %201 = vmatprep.subr.mxu0 0.0
    %202 = vmatpush1.msra.mxu0 0.0
    %203 = vmatprep.subr.mxu0 0.0
    %204 = vmatpush1.msra.mxu0 0.0
    %205 = vmatprep.subr.mxu0 0.0
    %206 = vmatpush1.msra.mxu0 0.0
    %207 = vmatprep.subr.mxu0 0.0
    %208 = vmatpush1.msra.mxu0 0.0
    %209 = vmatprep.subr.mxu0 0.0
    %210 = vmatpush1.msra.mxu0 0.0
    %211 = vmatprep.subr.mxu0 0.0
    %212 = vmatpush1.msra.mxu0 0.0
    %213 = vmatprep.subr.mxu0 0.0
    %214 = vmatpush1.msra.mxu0 0.0
    %215 = vmatprep.subr.mxu0 0.0
    %216 = vmatpush1.msra.mxu0 0.0
    %217 = vmatprep.subr.mxu0 0.0
    %218 = vmatpush1.msra.mxu0 0.0
    %219 = vmatprep.subr.mxu0 0.0
    %220 = vmatpush1.msra.mxu0 0.0
    %221 = vmatprep.subr.mxu0 0.0
    %222 = vmatpush1.msra.mxu0 0.0
    %223 = vmatprep.subr.mxu0 0.0
    %224 = vmatpush1.msra.mxu0 0.0
    %225 = vmatprep.subr.mxu0 0.0
    %226 = vmatpush1.msra.mxu0 0.0
    %227 = vmatprep.subr.mxu0 0.0
    %228 = vmatpush1.msra.mxu0 0.0
    %229 = vmatprep.mubr.f32.mxu0 0.0
    %230 = vmatmul.mubr.f32.gmra.mrb[0].mxu0 %v70
    %v231 = vpop.f32.mrb[0].mxu0
    %v232 = vadd.f32 %v67, %v231
    %v233 = vpop.f32.mrb[0].mxu0
    %234 = vmatprep.mubr.f32.mxu0 0.0
    %235 = vmatmul.mubr.f32.gmra.mrb[0].mxu0 %v73
    %v236 = vpop.f32.mrb[0].mxu0
    %v237 = vadd.f32 %v67, %v236
    %v238 = vpop.f32.mrb[0].mxu0
    %239 = vmatprep.mubr.f32.mxu0 0.0
    %240 = vmatmul.mubr.f32.gmra.mrb[0].mxu0 %v76
    %v241 = vpop.f32.mrb[0].mxu0
    %v242 = vadd.f32 %v67, %v241
    %v243 = vpop.f32.mrb[0].mxu0
    %244 = vmatprep.mubr.f32.mxu0 0.0
    %245 = vmatmul.mubr.f32.gmra.mrb[0].mxu0 %v79
    %v246 = vpop.f32.mrb[0].mxu0
    %v247 = vadd.f32 %v67, %v246
    %v248 = vpop.f32.mrb[0].mxu0
    %249 = vmatprep.mubr.f32.mxu0 0.0
    %250 = vmatmul.mubr.f32.gmra.mrb[0].mxu0 %v82
    %v251 = vpop.f32.mrb[0].mxu0
    %v252 = vadd.f32 %v67, %v251
    %v253 = vpop.f32.mrb[0].mxu0
    %254 = vmatprep.mubr.f32.mxu0 0.0
    %255 = vmatmul.mubr.f32.gmra.mrb[0].mxu0 %v85
    %v256 = vpop.f32.mrb[0].mxu0
    %v257 = vadd.f32 %v67, %v256
    %v258 = vpop.f32.mrb[0].mxu0
    %259 = vmatprep.mubr.f32.mxu0 0.0
    %260 = vmatmul.mubr.f32.gmra.mrb[0].mxu0 %v88
    %v261 = vpop.f32.mrb[0].mxu0
    %v262 = vadd.f32 %v67, %v261
    %v263 = vpop.f32.mrb[0].mxu0
    %264 = vmatprep.mubr.f32.mxu0 0.0
    %265 = vmatmul.mubr.f32.gmra.mrb[0].mxu0 %v91
    %v266 = vpop.f32.mrb[0].mxu0
    %v267 = vadd.f32 %v67, %v266
    %v268 = vpop.f32.mrb[0].mxu0
    %269 = vmatprep.mubr.f32.mxu0 0.0
    %270 = vmatmul.mubr.f32.gmra.mrb[0].mxu0 %v94
    %v271 = vpop.f32.mrb[0].mxu0
    %v272 = vadd.f32 %v67, %v271
    %v273 = vpop.f32.mrb[0].mxu0
    %274 = vmatprep.mubr.f32.mxu0 0.0
    %275 = vmatmul.mubr.f32.gmra.mrb[0].mxu0 %v97
    %v276 = vpop.f32.mrb[0].mxu0
    %v277 = vadd.f32 %v67, %v276
    %v278 = vpop.f32.mrb[0].mxu0
    %279 = vmatprep.mubr.f32.mxu0 0.0
    %280 = vmatmul.mubr.f32.gmra.mrb[0].mxu0 %v100
    %v281 = vpop.f32.mrb[0].mxu0
    %v282 = vadd.f32 %v67, %v281
    %v283 = vpop.f32.mrb[0].mxu0
    %284 = vmatprep.mubr.f32.mxu0 0.0
    %285 = vmatmul.mubr.f32.gmra.mrb[0].mxu0 %v103
    %v286 = vpop.f32.mrb[0].mxu0
    %v287 = vadd.f32 %v67, %v286
    %v288 = vpop.f32.mrb[0].mxu0
    %289 = vmatprep.mubr.f32.mxu0 0.0
    %290 = vmatmul.mubr.f32.gmra.mrb[0].mxu0 %v106
    %v291 = vpop.f32.mrb[0].mxu0
    %v292 = vadd.f32 %v67, %v291
    %v293 = vpop.f32.mrb[0].mxu0
    %294 = vmatprep.mubr.f32.mxu0 0.0
    %295 = vmatmul.mubr.f32.gmra.mrb[0].mxu0 %v109
    %v296 = vpop.f32.mrb[0].mxu0
    %v297 = vadd.f32 %v67, %v296
    %v298 = vpop.f32.mrb[0].mxu0
    %299 = vmatprep.mubr.f32.mxu0 0.0
    %300 = vmatmul.mubr.f32.gmra.mrb[0].mxu0 %v112
    %v301 = vpop.f32.mrb[0].mxu0
    %v302 = vadd.f32 %v67, %v301
    %v303 = vpop.f32.mrb[0].mxu0
    %304 = vmatprep.mubr.f32.mxu0 0.0
    %305 = vmatmul.mubr.f32.gmra.mrb[0].mxu0 %v115
    %v306 = vpop.f32.mrb[0].mxu0
    %v307 = vadd.f32 %v67, %v306
    %v308 = vpop.f32.mrb[0].mxu0
    %309 = vmatprep.mubr.f32.mxu0 0.0
    %310 = vmatmul.mubr.f32.gmra.mrb[0].mxu0 %v118
    %v311 = vpop.f32.mrb[0].mxu0
    %v312 = vadd.f32 %v67, %v311
    %v313 = vpop.f32.mrb[0].mxu0
    %314 = vmatprep.mubr.f32.mxu0 0.0
    %315 = vmatmul.mubr.f32.gmra.mrb[0].mxu0 %v121
    %v316 = vpop.f32.mrb[0].mxu0
    %v317 = vadd.f32 %v67, %v316
    %v318 = vpop.f32.mrb[0].mxu0
    %319 = vmatprep.mubr.f32.mxu0 0.0
    %320 = vmatmul.mubr.f32.gmra.mrb[0].mxu0 %v124
    %v321 = vpop.f32.mrb[0].mxu0
    %v322 = vadd.f32 %v67, %v321
    %v323 = vpop.f32.mrb[0].mxu0
    %324 = vmatprep.mubr.f32.mxu0 0.0
    %325 = vmatmul.mubr.f32.gmra.mrb[0].mxu0 %v127
    %v326 = vpop.f32.mrb[0].mxu0
    %v327 = vadd.f32 %v67, %v326
    %v328 = vpop.f32.mrb[0].mxu0
    %329 = vmatprep.mubr.f32.mxu0 0.0
    %330 = vmatmul.mubr.f32.gmra.mrb[0].mxu0 %v130
    %v331 = vpop.f32.mrb[0].mxu0
    %v332 = vadd.f32 %v67, %v331
    %v333 = vpop.f32.mrb[0].mxu0
    %334 = vmatprep.mubr.f32.mxu0 0.0
    %335 = vmatmul.mubr.f32.gmra.mrb[0].mxu0 %v133
    %v336 = vpop.f32.mrb[0].mxu0
    %v337 = vadd.f32 %v67, %v336
    %v338 = vpop.f32.mrb[0].mxu0
    %339 = vmatprep.mubr.f32.mxu0 0.0
    %340 = vmatmul.mubr.f32.gmra.mrb[0].mxu0 %v136
    %v341 = vpop.f32.mrb[0].mxu0
    %v342 = vadd.f32 %v67, %v341
    %v343 = vpop.f32.mrb[0].mxu0
    %344 = vmatprep.mubr.f32.mxu0 0.0
    %345 = vmatmul.mubr.f32.gmra.mrb[0].mxu0 %v139
    %v346 = vpop.f32.mrb[0].mxu0
    %v347 = vadd.f32 %v67, %v346
    %v348 = vpop.f32.mrb[0].mxu0
    %349 = vmatprep.mubr.f32.mxu0 0.0
    %350 = vmatmul.mubr.f32.gmra.mrb[0].mxu0 %v142
    %v351 = vpop.f32.mrb[0].mxu0
    %v352 = vadd.f32 %v67, %v351
    %v353 = vpop.f32.mrb[0].mxu0
    %354 = vmatprep.mubr.f32.mxu0 0.0
    %355 = vmatmul.mubr.f32.gmra.mrb[0].mxu0 %v145
    %v356 = vpop.f32.mrb[0].mxu0
    %v357 = vadd.f32 %v67, %v356
    %v358 = vpop.f32.mrb[0].mxu0
    %359 = vmatprep.mubr.f32.mxu0 0.0
    %360 = vmatmul.mubr.f32.gmra.mrb[0].mxu0 %v148
    %v361 = vpop.f32.mrb[0].mxu0
    %v362 = vadd.f32 %v67, %v361
    %v363 = vpop.f32.mrb[0].mxu0
    %364 = vmatprep.mubr.f32.mxu0 0.0
    %365 = vmatmul.mubr.f32.gmra.mrb[0].mxu0 %v151
    %v366 = vpop.f32.mrb[0].mxu0
    %v367 = vadd.f32 %v67, %v366
    %v368 = vpop.f32.mrb[0].mxu0
    %369 = vmatprep.mubr.f32.mxu0 0.0
    %370 = vmatmul.mubr.f32.gmra.mrb[0].mxu0 %v154
    %v371 = vpop.f32.mrb[0].mxu0
    %v372 = vadd.f32 %v67, %v371
    %v373 = vpop.f32.mrb[0].mxu0
    %374 = vmatprep.mubr.f32.mxu0 0.0
    %375 = vmatmul.mubr.f32.gmra.mrb[0].mxu0 %v157
    %v376 = vpop.f32.mrb[0].mxu0
    %v377 = vadd.f32 %v67, %v376
    %v378 = vpop.f32.mrb[0].mxu0
    %379 = vmatprep.mubr.f32.mxu0 0.0
    %380 = vmatmul.mubr.f32.gmra.mrb[0].mxu0 %v160
    %v381 = vpop.f32.mrb[0].mxu0
    %v382 = vadd.f32 %v67, %v381
    %v383 = vpop.f32.mrb[0].mxu0
    %384 = vmatprep.mubr.f32.mxu0 0.0
    %385 = vmatmul.mubr.f32.gmra.mrb[0].mxu0 %v163
    %v386 = vpop.f32.mrb[0].mxu0
    %v387 = vadd.f32 %v67, %v386
    %v388 = vpop.f32.mrb[0].mxu0
    %389 = vdwg.mxu0
    %v390 = vmax.f32 %v232, 0.0
    %v391 = vmax.f32 %v237, 0.0
    %v392 = vmax.f32 %v242, 0.0
    %v393 = vmax.f32 %v247, 0.0
    %v394 = vmax.f32 %v252, 0.0
    %v395 = vmax.f32 %v257, 0.0
    %v396 = vmax.f32 %v262, 0.0
    %v397 = vmax.f32 %v267, 0.0
    %v398 = vmax.f32 %v272, 0.0
    %v399 = vmax.f32 %v277, 0.0
    %v400 = vmax.f32 %v282, 0.0
    %v401 = vmax.f32 %v287, 0.0
    %v402 = vmax.f32 %v292, 0.0
    %v403 = vmax.f32 %v297, 0.0
    %v404 = vmax.f32 %v302, 0.0
    %v405 = vmax.f32 %v307, 0.0
    %v406 = vmax.f32 %v312, 0.0
    %v407 = vmax.f32 %v317, 0.0
    %v408 = vmax.f32 %v322, 0.0
    %v409 = vmax.f32 %v327, 0.0
    %v410 = vmax.f32 %v332, 0.0
    %v411 = vmax.f32 %v337, 0.0
    %v412 = vmax.f32 %v342, 0.0
    %v413 = vmax.f32 %v347, 0.0
    %v414 = vmax.f32 %v352, 0.0
    %v415 = vmax.f32 %v357, 0.0
    %v416 = vmax.f32 %v362, 0.0
    %v417 = vmax.f32 %v367, 0.0
    %v418 = vmax.f32 %v372, 0.0
    %v419 = vmax.f32 %v377, 0.0
    %v420 = vmax.f32 %v382, 0.0
    %v421 = vmax.f32 %v387, 0.0
    %v422 = vlaneseq
    %v423 = vshrl.u32 %v422, 7
    %v424 = vsub.s32 0, %v423
    %v425 = vrot.slane %v54, %v424
    %vm426 = vcmask 523264
    %v428 = vsel %vm426, %v390, 0
    %v431 = vsel %vm426, %v391, 0
    %v434 = vsel %vm426, %v392, 0
    %v437 = vsel %vm426, %v393, 0
    %v440 = vsel %vm426, %v394, 0
    %v443 = vsel %vm426, %v395, 0
    %v446 = vsel %vm426, %v396, 0
    %v449 = vsel %vm426, %v397, 0
    %v452 = vsel %vm426, %v398, 0
    %v455 = vsel %vm426, %v399, 0
    %v458 = vsel %vm426, %v400, 0
    %v461 = vsel %vm426, %v401, 0
    %v464 = vsel %vm426, %v402, 0
    %v467 = vsel %vm426, %v403, 0
    %v470 = vsel %vm426, %v404, 0
    %v473 = vsel %vm426, %v405, 0
    %v476 = vsel %vm426, %v406, 0
    %v479 = vsel %vm426, %v407, 0
    %v482 = vsel %vm426, %v408, 0
    %v485 = vsel %vm426, %v409, 0
    %v488 = vsel %vm426, %v410, 0
    %v491 = vsel %vm426, %v411, 0
    %v494 = vsel %vm426, %v412, 0
    %v497 = vsel %vm426, %v413, 0
    %v500 = vsel %vm426, %v414, 0
    %v503 = vsel %vm426, %v415, 0
    %v506 = vsel %vm426, %v416, 0
    %v509 = vsel %vm426, %v417, 0
    %v512 = vsel %vm426, %v418, 0
    %v515 = vsel %vm426, %v419, 0
    %v518 = vsel %vm426, %v420, 0
    %v521 = vsel %vm426, %v421, 0
    %523 = vmatprep.subr.mxu0 0.0
    %524 = vmatpush1.msra.mxu0 %v46
    %525 = vmatprep.subr.mxu0 0.0
    %526 = vmatpush1.msra.mxu0 %v47
    %527 = vmatprep.subr.mxu0 0.0
    %528 = vmatpush1.msra.mxu0 %v48
    %529 = vmatprep.subr.mxu0 0.0
    %530 = vmatpush1.msra.mxu0 %v49
    %531 = vmatprep.subr.mxu0 0.0
    %532 = vmatpush1.msra.mxu0 %v50
    %533 = vmatprep.subr.mxu0 0.0
    %534 = vmatpush1.msra.mxu0 %v51
    %535 = vmatprep.subr.mxu0 0.0
    %536 = vmatpush1.msra.mxu0 %v52
    %537 = vmatprep.subr.mxu0 0.0
    %538 = vmatpush1.msra.mxu0 %v53
    %539 = vmatprep.subr.mxu0 0.0
    %540 = vmatpush1.msra.mxu0 0.0
    %541 = vmatprep.subr.mxu0 0.0
    %542 = vmatpush1.msra.mxu0 0.0
    %543 = vmatprep.subr.mxu0 0.0
    %544 = vmatpush1.msra.mxu0 0.0
    %545 = vmatprep.subr.mxu0 0.0
    %546 = vmatpush1.msra.mxu0 0.0
    %547 = vmatprep.subr.mxu0 0.0
    %548 = vmatpush1.msra.mxu0 0.0
    %549 = vmatprep.subr.mxu0 0.0
    %550 = vmatpush1.msra.mxu0 0.0
    %551 = vmatprep.subr.mxu0 0.0
    %552 = vmatpush1.msra.mxu0 0.0
    %553 = vmatprep.subr.mxu0 0.0
    %554 = vmatpush1.msra.mxu0 0.0
    %555 = vmatprep.subr.mxu0 0.0
    %556 = vmatpush1.msra.mxu0 0.0
    %557 = vmatprep.subr.mxu0 0.0
    %558 = vmatpush1.msra.mxu0 0.0
    %559 = vmatprep.subr.mxu0 0.0
    %560 = vmatpush1.msra.mxu0 0.0
    %561 = vmatprep.subr.mxu0 0.0
    %562 = vmatpush1.msra.mxu0 0.0
    %563 = vmatprep.subr.mxu0 0.0
    %564 = vmatpush1.msra.mxu0 0.0
    %565 = vmatprep.subr.mxu0 0.0
    %566 = vmatpush1.msra.mxu0 0.0
    %567 = vmatprep.subr.mxu0 0.0
    %568 = vmatpush1.msra.mxu0 0.0
    %569 = vmatprep.subr.mxu0 0.0
    %570 = vmatpush1.msra.mxu0 0.0
    %571 = vmatprep.subr.mxu0 0.0
    %572 = vmatpush1.msra.mxu0 0.0
    %573 = vmatprep.subr.mxu0 0.0
    %574 = vmatpush1.msra.mxu0 0.0
    %575 = vmatprep.subr.mxu0 0.0
    %576 = vmatpush1.msra.mxu0 0.0
    %577 = vmatprep.subr.mxu0 0.0
    %578 = vmatpush1.msra.mxu0 0.0
    %579 = vmatprep.subr.mxu0 0.0
    %580 = vmatpush1.msra.mxu0 0.0
    %581 = vmatprep.subr.mxu0 0.0
    %582 = vmatpush1.msra.mxu0 0.0
    %583 = vmatprep.subr.mxu0 0.0
    %584 = vmatpush1.msra.mxu0 0.0
    %585 = vmatprep.subr.mxu0 0.0
    %586 = vmatpush1.msra.mxu0 0.0
    %587 = vmatprep.mubr.f32.mxu0 0.0
    %588 = vmatmul.mubr.f32.gmra.mrb[0].mxu0 %v428
    %v589 = vpop.f32.mrb[0].mxu0
    %v590 = vadd.f32 %v425, %v589
    %v591 = vpop.f32.mrb[0].mxu0
    %592 = vmatprep.mubr.f32.mxu0 0.0
    %593 = vmatmul.mubr.f32.gmra.mrb[0].mxu0 %v431
    %v594 = vpop.f32.mrb[0].mxu0
    %v595 = vadd.f32 %v425, %v594
    %v596 = vpop.f32.mrb[0].mxu0
    %597 = vmatprep.mubr.f32.mxu0 0.0
    %598 = vmatmul.mubr.f32.gmra.mrb[0].mxu0 %v434
    %v599 = vpop.f32.mrb[0].mxu0
    %v600 = vadd.f32 %v425, %v599
    %v601 = vpop.f32.mrb[0].mxu0
    %602 = vmatprep.mubr.f32.mxu0 0.0
    %603 = vmatmul.mubr.f32.gmra.mrb[0].mxu0 %v437
    %v604 = vpop.f32.mrb[0].mxu0
    %v605 = vadd.f32 %v425, %v604
    %v606 = vpop.f32.mrb[0].mxu0
    %607 = vmatprep.mubr.f32.mxu0 0.0
    %608 = vmatmul.mubr.f32.gmra.mrb[0].mxu0 %v440
    %v609 = vpop.f32.mrb[0].mxu0
    %v610 = vadd.f32 %v425, %v609
    %v611 = vpop.f32.mrb[0].mxu0
    %612 = vmatprep.mubr.f32.mxu0 0.0
    %613 = vmatmul.mubr.f32.gmra.mrb[0].mxu0 %v443
    %v614 = vpop.f32.mrb[0].mxu0
    %v615 = vadd.f32 %v425, %v614
    %v616 = vpop.f32.mrb[0].mxu0
    %617 = vmatprep.mubr.f32.mxu0 0.0
    %618 = vmatmul.mubr.f32.gmra.mrb[0].mxu0 %v446
    %v619 = vpop.f32.mrb[0].mxu0
    %v620 = vadd.f32 %v425, %v619
    %v621 = vpop.f32.mrb[0].mxu0
    %622 = vmatprep.mubr.f32.mxu0 0.0
    %623 = vmatmul.mubr.f32.gmra.mrb[0].mxu0 %v449
    %v624 = vpop.f32.mrb[0].mxu0
    %v625 = vadd.f32 %v425, %v624
    %v626 = vpop.f32.mrb[0].mxu0
    %627 = vmatprep.mubr.f32.mxu0 0.0
    %628 = vmatmul.mubr.f32.gmra.mrb[0].mxu0 %v452
    %v629 = vpop.f32.mrb[0].mxu0
    %v630 = vadd.f32 %v425, %v629
    %v631 = vpop.f32.mrb[0].mxu0
    %632 = vmatprep.mubr.f32.mxu0 0.0
    %633 = vmatmul.mubr.f32.gmra.mrb[0].mxu0 %v455
    %v634 = vpop.f32.mrb[0].mxu0
    %v635 = vadd.f32 %v425, %v634
    %v636 = vpop.f32.mrb[0].mxu0
    %637 = vmatprep.mubr.f32.mxu0 0.0
    %638 = vmatmul.mubr.f32.gmra.mrb[0].mxu0 %v458
    %v639 = vpop.f32.mrb[0].mxu0
    %v640 = vadd.f32 %v425, %v639
    %v641 = vpop.f32.mrb[0].mxu0
    %642 = vmatprep.mubr.f32.mxu0 0.0
    %643 = vmatmul.mubr.f32.gmra.mrb[0].mxu0 %v461
    %v644 = vpop.f32.mrb[0].mxu0
    %v645 = vadd.f32 %v425, %v644
    %v646 = vpop.f32.mrb[0].mxu0
    %647 = vmatprep.mubr.f32.mxu0 0.0
    %648 = vmatmul.mubr.f32.gmra.mrb[0].mxu0 %v464
    %v649 = vpop.f32.mrb[0].mxu0
    %v650 = vadd.f32 %v425, %v649
    %v651 = vpop.f32.mrb[0].mxu0
    %652 = vmatprep.mubr.f32.mxu0 0.0
    %653 = vmatmul.mubr.f32.gmra.mrb[0].mxu0 %v467
    %v654 = vpop.f32.mrb[0].mxu0
    %v655 = vadd.f32 %v425, %v654
    %v656 = vpop.f32.mrb[0].mxu0
    %657 = vmatprep.mubr.f32.mxu0 0.0
    %658 = vmatmul.mubr.f32.gmra.mrb[0].mxu0 %v470
    %v659 = vpop.f32.mrb[0].mxu0
    %v660 = vadd.f32 %v425, %v659
    %v661 = vpop.f32.mrb[0].mxu0
    %662 = vmatprep.mubr.f32.mxu0 0.0
    %663 = vmatmul.mubr.f32.gmra.mrb[0].mxu0 %v473
    %v664 = vpop.f32.mrb[0].mxu0
    %v665 = vadd.f32 %v425, %v664
    %v666 = vpop.f32.mrb[0].mxu0
    %667 = vmatprep.mubr.f32.mxu0 0.0
    %668 = vmatmul.mubr.f32.gmra.mrb[0].mxu0 %v476
    %v669 = vpop.f32.mrb[0].mxu0
    %v670 = vadd.f32 %v425, %v669
    %v671 = vpop.f32.mrb[0].mxu0
    %672 = vmatprep.mubr.f32.mxu0 0.0
    %673 = vmatmul.mubr.f32.gmra.mrb[0].mxu0 %v479
    %v674 = vpop.f32.mrb[0].mxu0
    %v675 = vadd.f32 %v425, %v674
    %v676 = vpop.f32.mrb[0].mxu0
    %677 = vmatprep.mubr.f32.mxu0 0.0
    %678 = vmatmul.mubr.f32.gmra.mrb[0].mxu0 %v482
    %v679 = vpop.f32.mrb[0].mxu0
    %v680 = vadd.f32 %v425, %v679
    %v681 = vpop.f32.mrb[0].mxu0
    %682 = vmatprep.mubr.f32.mxu0 0.0
    %683 = vmatmul.mubr.f32.gmra.mrb[0].mxu0 %v485
    %v684 = vpop.f32.mrb[0].mxu0
    %v685 = vadd.f32 %v425, %v684
    %v686 = vpop.f32.mrb[0].mxu0
    %687 = vmatprep.mubr.f32.mxu0 0.0
    %688 = vmatmul.mubr.f32.gmra.mrb[0].mxu0 %v488
    %v689 = vpop.f32.mrb[0].mxu0
    %v690 = vadd.f32 %v425, %v689
    %v691 = vpop.f32.mrb[0].mxu0
    %692 = vmatprep.mubr.f32.mxu0 0.0
    %693 = vmatmul.mubr.f32.gmra.mrb[0].mxu0 %v491
    %v694 = vpop.f32.mrb[0].mxu0
    %v695 = vadd.f32 %v425, %v694
    %v696 = vpop.f32.mrb[0].mxu0
    %697 = vmatprep.mubr.f32.mxu0 0.0
    %698 = vmatmul.mubr.f32.gmra.mrb[0].mxu0 %v494
    %v699 = vpop.f32.mrb[0].mxu0
    %v700 = vadd.f32 %v425, %v699
    %v701 = vpop.f32.mrb[0].mxu0
    %702 = vmatprep.mubr.f32.mxu0 0.0
    %703 = vmatmul.mubr.f32.gmra.mrb[0].mxu0 %v497
    %v704 = vpop.f32.mrb[0].mxu0
    %v705 = vadd.f32 %v425, %v704
    %v706 = vpop.f32.mrb[0].mxu0
    %707 = vmatprep.mubr.f32.mxu0 0.0
    %708 = vmatmul.mubr.f32.gmra.mrb[0].mxu0 %v500
    %v709 = vpop.f32.mrb[0].mxu0
    %v710 = vadd.f32 %v425, %v709
    %v711 = vpop.f32.mrb[0].mxu0
    %712 = vmatprep.mubr.f32.mxu0 0.0
    %713 = vmatmul.mubr.f32.gmra.mrb[0].mxu0 %v503
    %v714 = vpop.f32.mrb[0].mxu0
    %v715 = vadd.f32 %v425, %v714
    %v716 = vpop.f32.mrb[0].mxu0
    %717 = vmatprep.mubr.f32.mxu0 0.0
    %718 = vmatmul.mubr.f32.gmra.mrb[0].mxu0 %v506
    %v719 = vpop.f32.mrb[0].mxu0
    %v720 = vadd.f32 %v425, %v719
    %v721 = vpop.f32.mrb[0].mxu0
    %722 = vmatprep.mubr.f32.mxu0 0.0
    %723 = vmatmul.mubr.f32.gmra.mrb[0].mxu0 %v509
    %v724 = vpop.f32.mrb[0].mxu0
    %v725 = vadd.f32 %v425, %v724
    %v726 = vpop.f32.mrb[0].mxu0
    %727 = vmatprep.mubr.f32.mxu0 0.0
    %728 = vmatmul.mubr.f32.gmra.mrb[0].mxu0 %v512
    %v729 = vpop.f32.mrb[0].mxu0
    %v730 = vadd.f32 %v425, %v729
    %v731 = vpop.f32.mrb[0].mxu0
    %732 = vmatprep.mubr.f32.mxu0 0.0
    %733 = vmatmul.mubr.f32.gmra.mrb[0].mxu0 %v515
    %v734 = vpop.f32.mrb[0].mxu0
    %v735 = vadd.f32 %v425, %v734
    %v736 = vpop.f32.mrb[0].mxu0
    %737 = vmatprep.mubr.f32.mxu0 0.0
    %738 = vmatmul.mubr.f32.gmra.mrb[0].mxu0 %v518
    %v739 = vpop.f32.mrb[0].mxu0
    %v740 = vadd.f32 %v425, %v739
    %v741 = vpop.f32.mrb[0].mxu0
    %742 = vmatprep.mubr.f32.mxu0 0.0
    %743 = vmatmul.mubr.f32.gmra.mrb[0].mxu0 %v521
    %v744 = vpop.f32.mrb[0].mxu0
    %v745 = vadd.f32 %v425, %v744
    %v746 = vpop.f32.mrb[0].mxu0
    %747 = vdwg.mxu0
    %v748 = vmax.f32 %v590, 0.0
    %v749 = vmax.f32 %v595, 0.0
    %v750 = vmax.f32 %v600, 0.0
    %v751 = vmax.f32 %v605, 0.0
    %v752 = vmax.f32 %v610, 0.0
    %v753 = vmax.f32 %v615, 0.0
    %v754 = vmax.f32 %v620, 0.0
    %v755 = vmax.f32 %v625, 0.0
    %v756 = vmax.f32 %v630, 0.0
    %v757 = vmax.f32 %v635, 0.0
    %v758 = vmax.f32 %v640, 0.0
    %v759 = vmax.f32 %v645, 0.0
    %v760 = vmax.f32 %v650, 0.0
    %v761 = vmax.f32 %v655, 0.0
    %v762 = vmax.f32 %v660, 0.0
    %v763 = vmax.f32 %v665, 0.0
    %v764 = vmax.f32 %v670, 0.0
    %v765 = vmax.f32 %v675, 0.0
    %v766 = vmax.f32 %v680, 0.0
    %v767 = vmax.f32 %v685, 0.0
    %v768 = vmax.f32 %v690, 0.0
    %v769 = vmax.f32 %v695, 0.0
    %v770 = vmax.f32 %v700, 0.0
    %v771 = vmax.f32 %v705, 0.0
    %v772 = vmax.f32 %v710, 0.0
    %v773 = vmax.f32 %v715, 0.0
    %v774 = vmax.f32 %v720, 0.0
    %v775 = vmax.f32 %v725, 0.0
    %v776 = vmax.f32 %v730, 0.0
    %v777 = vmax.f32 %v735, 0.0
    %v778 = vmax.f32 %v740, 0.0
    %v779 = vmax.f32 %v745, 0.0
    %v780 = vsel %vm426, %v748, 0.0
    %v781 = vsel %vm426, %v749, 0.0
    %v782 = vadd.f32 %v780, %v781
    %v783 = vsel %vm426, %v750, 0.0
    %v784 = vadd.f32 %v782, %v783
    %v785 = vsel %vm426, %v751, 0.0
    %v786 = vadd.f32 %v784, %v785
    %v787 = vsel %vm426, %v752, 0.0
    %v788 = vadd.f32 %v786, %v787
    %v789 = vsel %vm426, %v753, 0.0
    %v790 = vadd.f32 %v788, %v789
    %v791 = vsel %vm426, %v754, 0.0
    %v792 = vadd.f32 %v790, %v791
    %v793 = vsel %vm426, %v755, 0.0
    %v794 = vadd.f32 %v792, %v793
    %v795 = vsel %vm426, %v756, 0.0
    %v796 = vadd.f32 %v794, %v795
    %v797 = vsel %vm426, %v757, 0.0
    %v798 = vadd.f32 %v796, %v797
    %v799 = vsel %vm426, %v758, 0.0
    %v800 = vadd.f32 %v798, %v799
    %v801 = vsel %vm426, %v759, 0.0
    %v802 = vadd.f32 %v800, %v801
    %v803 = vsel %vm426, %v760, 0.0
    %v804 = vadd.f32 %v802, %v803
    %v805 = vsel %vm426, %v761, 0.0
    %v806 = vadd.f32 %v804, %v805
    %v807 = vsel %vm426, %v762, 0.0
    %v808 = vadd.f32 %v806, %v807
    %v809 = vsel %vm426, %v763, 0.0
    %v810 = vadd.f32 %v808, %v809
    %v811 = vrot.slane %v810, 4
    %v812 = vadd.f32 %v810, %v811
    %v813 = vrot.slane %v812, 2
    %v814 = vadd.f32 %v812, %v813
    %v815 = vrot.slane %v814, 1
    %v816 = vadd.f32 %v814, %v815
    %v817 = vsel %vm426, %v764, 0.0
    %v818 = vsel %vm426, %v765, 0.0
    %v819 = vadd.f32 %v817, %v818
    %v820 = vsel %vm426, %v766, 0.0
    %v821 = vadd.f32 %v819, %v820
    %v822 = vsel %vm426, %v767, 0.0
    %v823 = vadd.f32 %v821, %v822
    %v824 = vsel %vm426, %v768, 0.0
    %v825 = vadd.f32 %v823, %v824
    %v826 = vsel %vm426, %v769, 0.0
    %v827 = vadd.f32 %v825, %v826
    %v828 = vsel %vm426, %v770, 0.0
    %v829 = vadd.f32 %v827, %v828
    %v830 = vsel %vm426, %v771, 0.0
    %v831 = vadd.f32 %v829, %v830
    %v832 = vsel %vm426, %v772, 0.0
    %v833 = vadd.f32 %v831, %v832
    %v834 = vsel %vm426, %v773, 0.0
    %v835 = vadd.f32 %v833, %v834
    %v836 = vsel %vm426, %v774, 0.0
    %v837 = vadd.f32 %v835, %v836
    %v838 = vsel %vm426, %v775, 0.0
    %v839 = vadd.f32 %v837, %v838
    %v840 = vsel %vm426, %v776, 0.0
    %v841 = vadd.f32 %v839, %v840
    %v842 = vsel %vm426, %v777, 0.0
    %v843 = vadd.f32 %v841, %v842
    %v844 = vsel %vm426, %v778, 0.0
    %v845 = vadd.f32 %v843, %v844
    %v846 = vsel %vm426, %v779, 0.0
    %v847 = vadd.f32 %v845, %v846
    %v848 = vrot.slane %v847, 4
    %v849 = vadd.f32 %v847, %v848
    %v850 = vrot.slane %v849, 2
    %v851 = vadd.f32 %v849, %v850
    %v852 = vrot.slane %v851, 1
    %v853 = vadd.f32 %v851, %v852
    %v854 = vmul.f32 %v816, 0.0078125
    %v855 = vmul.f32 %v853, 0.0078125
    %v856 = vlaneseq
    %v857 = vshrl.u32 %v856, 7
    %v858 = vsub.s32 0, %v857
    %v859 = vrot.slane %v63, %v858
    %vm862 = vcmask 1041409
    %v863 = vsel %vm862, %v855, %v854
    %v864 = vsel %vm426, %v863, 0
    %866 = vmatprep.subr.mxu0 0.0
    %867 = vmatpush1.msra.mxu0 %v55
    %868 = vmatprep.subr.mxu0 0.0
    %869 = vmatpush1.msra.mxu0 %v56
    %870 = vmatprep.subr.mxu0 0.0
    %871 = vmatpush1.msra.mxu0 %v57
    %872 = vmatprep.subr.mxu0 0.0
    %873 = vmatpush1.msra.mxu0 %v58
    %874 = vmatprep.subr.mxu0 0.0
    %875 = vmatpush1.msra.mxu0 %v59
    %876 = vmatprep.subr.mxu0 0.0
    %877 = vmatpush1.msra.mxu0 %v60
    %878 = vmatprep.subr.mxu0 0.0
    %879 = vmatpush1.msra.mxu0 %v61
    %880 = vmatprep.subr.mxu0 0.0
    %881 = vmatpush1.msra.mxu0 %v62
    %882 = vmatprep.subr.mxu0 0.0
    %883 = vmatpush1.msra.mxu0 0.0
    %884 = vmatprep.subr.mxu0 0.0
    %885 = vmatpush1.msra.mxu0 0.0
    %886 = vmatprep.subr.mxu0 0.0
    %887 = vmatpush1.msra.mxu0 0.0
    %888 = vmatprep.subr.mxu0 0.0
    %889 = vmatpush1.msra.mxu0 0.0
    %890 = vmatprep.subr.mxu0 0.0
    %891 = vmatpush1.msra.mxu0 0.0
    %892 = vmatprep.subr.mxu0 0.0
    %893 = vmatpush1.msra.mxu0 0.0
    %894 = vmatprep.subr.mxu0 0.0
    %895 = vmatpush1.msra.mxu0 0.0
    %896 = vmatprep.subr.mxu0 0.0
    %897 = vmatpush1.msra.mxu0 0.0
    %898 = vmatprep.subr.mxu0 0.0
    %899 = vmatpush1.msra.mxu0 0.0
    %900 = vmatprep.subr.mxu0 0.0
    %901 = vmatpush1.msra.mxu0 0.0
    %902 = vmatprep.subr.mxu0 0.0
    %903 = vmatpush1.msra.mxu0 0.0
    %904 = vmatprep.subr.mxu0 0.0
    %905 = vmatpush1.msra.mxu0 0.0
    %906 = vmatprep.subr.mxu0 0.0
    %907 = vmatpush1.msra.mxu0 0.0
    %908 = vmatprep.subr.mxu0 0.0
    %909 = vmatpush1.msra.mxu0 0.0
    %910 = vmatprep.subr.mxu0 0.0
    %911 = vmatpush1.msra.mxu0 0.0
    %912 = vmatprep.subr.mxu0 0.0
    %913 = vmatpush1.msra.mxu0 0.0
    %914 = vmatprep.subr.mxu0 0.0
    %915 = vmatpush1.msra.mxu0 0.0
    %916 = vmatprep.subr.mxu0 0.0
    %917 = vmatpush1.msra.mxu0 0.0
    %918 = vmatprep.subr.mxu0 0.0
    %919 = vmatpush1.msra.mxu0 0.0
    %920 = vmatprep.subr.mxu0 0.0
    %921 = vmatpush1.msra.mxu0 0.0
    %922 = vmatprep.subr.mxu0 0.0
    %923 = vmatpush1.msra.mxu0 0.0
    %924 = vmatprep.subr.mxu0 0.0
    %925 = vmatpush1.msra.mxu0 0.0
    %926 = vmatprep.subr.mxu0 0.0
    %927 = vmatpush1.msra.mxu0 0.0
    %928 = vmatprep.subr.mxu0 0.0
    %929 = vmatpush1.msra.mxu0 0.0
    %930 = vmatprep.mubr.f32.mxu0 0.0
    %931 = vmatmul.mubr.f32.gmra.mrb[0].mxu0 %v864
    %v932 = vpop.f32.mrb[0].mxu0
    %v933 = vadd.f32 %v859, %v932
    %v934 = vpop.f32.mrb[0].mxu0
    %935 = vdwg.mxu0
    %vm936 = vcmask 9216
    %937 = vst.msk [vmem:[#allocation2] sm:$0x3] %vm936, %v933
    // Predicated region
    $region10: #{tpu_custom_call.1} parent=1 // pred_check
      _
    $region11: #{tpu_custom_call.1} parent=1 // pred_check_branch
      %939 = sbr.rel (0) target = $region13
    $region12: #{tpu_custom_call.1} parent=1 // pred_region
      %s941 = ssub.s32 32, 32
      %942 = vsyncadd [#allocation3], %s941
      %s944 = sshll.u32 [#allocation2], 4
      %s945 = int_to_ptr.vmem [resolvable:$true] %s944
      %947 = dma.vmem_to_hbm [thread:$0]  %s945, 32, %s2, [#allocation3]
    $region13: #{tpu_custom_call.1} parent=1 // pred_fallthru
      _
    // Predicated region
    $region14: #{tpu_custom_call.1} parent=1 // pred_check
      _
    $region15: #{tpu_custom_call.1} parent=1 // pred_check_branch
      %949 = sbr.rel (0) target = $region17
    $region16: #{tpu_custom_call.1} parent=1 // pred_region
      %950 = dma.done [#allocation3], 32
    $region17: #{tpu_custom_call.1} parent=1 // pred_fallthru
      _
    %951 = vsyncpa [#allocation3], 1

</llo_original>
